<compile_context>
chip_gen: v7x
topology: tpu7x:2x2x1
jax: 0.10.0
libtpu: 0.0.40
codegen_flags: <defaults>
</compile_context>

<pallas_src>
import functools
import math

import jax
import jax.numpy as jnp
from jax.experimental import pallas as pl
from jax.experimental.pallas import tpu as pltpu


def _rnn_chunk_kernel(xw_ref, whh_hbm_ref, out_ref, whh_vmem, h_scratch, *,
                      chunk, unroll):
    """One grid step == `chunk` timesteps of the recurrence for one batch block.

    xw_ref:      (T, Bblk, Hp) compute dtype  precomputed x @ W_ih^T + (b_ih + b_hh)
    whh_hbm_ref: (Hp, Hp)      compute dtype  W_hh^T, left in HBM (memory_space=ANY)
    out_ref:     (T, Bblk, Hp) output dtype   hidden states for this chunk
    whh_vmem:    (Hp, Hp)      compute dtype  single-buffered VMEM copy of W_hh^T
    h_scratch:   (Bblk, Hp)    f32            hidden state carried across chunks
    """
    c = pl.program_id(1)  # time-chunk index (serial "arbitrary" axis)

    @pl.when(c == 0)
    def _():
        # One weight DMA per batch block; a BlockSpec would have double-buffered
        # this loop-invariant Hp^2 tensor for no benefit.
        pltpu.sync_copy(whh_hbm_ref, whh_vmem)
        h_scratch[...] = jnp.zeros_like(h_scratch)

    whh_t = whh_vmem[...]          # hoisted loop-invariant weight load

    def step(i, h_prev):
        # Matmul operands in compute dtype (bf16 by default), f32 accumulate;
        # the add / relu / carried h stay in f32 to avoid drift over long seqs.
        pre = xw_ref[i].astype(jnp.float32) + jnp.dot(
            h_prev.astype(whh_t.dtype), whh_t,
            preferred_element_type=jnp.float32)
        h_new = jnp.maximum(pre, 0.0)            # relu nonlinearity
        out_ref[i] = h_new.astype(out_ref.dtype)
        return h_new                             # h stays in vregs within the chunk

    h_last = jax.lax.fori_loop(0, chunk, step, h_scratch[...], unroll=unroll)
    h_scratch[...] = h_last                      # one scratch write per chunk


def _round_up(n, m):
    return ((n + m - 1) // m) * m


@functools.partial(
    jax.jit,
    static_argnames=("time_chunk", "batch_block", "compute_dtype",
                     "vmem_budget_bytes"))
def simple_rnn_pallas(x, weight_ih, weight_hh, bias_ih, bias_hh, *,
                      time_chunk=32, batch_block=None,
                      compute_dtype=jnp.bfloat16,
                      vmem_budget_bytes=40 * 1024 * 1024):
    """x: (S, B, I); weight_ih: (H, I); weight_hh: (H, H); biases: (H,).

    Returns (output (S, B, H), hx (B, H)) matching SimpleRNN_n.forward
    (batch_first=False, hx=None, nonlinearity='relu').
    """
    S, B, _ = x.shape
    H = weight_ih.shape[0]
    out_dtype = x.dtype
    compute_dtype = jnp.dtype(compute_dtype)

    B_pad = _round_up(B, 8)
    H_pad = _round_up(H, 128)

    # Split the batch over the parallel grid axis only when every block still
    # fills the MXU rows (>= 256); small blocks waste the 256-wide MXU while
    # re-streaming the full Hp^2 weight per timestep.
    if batch_block is None:
        batch_block = B_pad // 2 if (B_pad >= 512 and B_pad % 16 == 0) else B_pad
    assert B_pad % batch_block == 0 and batch_block % 8 == 0

    # Derive T from a per-core VMEM budget (v7x-safe default of 40 MiB):
    # double-buffered xw + double-buffered out blocks + single W_hh^T + f32 h.
    xw_isz = compute_dtype.itemsize
    out_isz = jnp.dtype(out_dtype).itemsize
    fixed_bytes = H_pad * H_pad * xw_isz + batch_block * H_pad * 4
    per_step_bytes = 2 * batch_block * H_pad * (xw_isz + out_isz)
    budget_T = max(1, (vmem_budget_bytes - fixed_bytes) // per_step_bytes)
    T = int(max(1, min(time_chunk, S, budget_T)))
    S_pad = _round_up(S, T)
    n_bblk = B_pad // batch_block
    n_chunks = S_pad // T
    vmem_limit = int(max(fixed_bytes + per_step_bytes * T + (4 << 20), 32 << 20))

    # ---- Hoisted input projection: one big parallel GEMM (compute-dtype operands,
    # f32 accumulate) with both biases fused in.  Pad the SMALL operands so the big
    # (S,B,Hp) activation is produced already padded (no extra HBM copy).
    # Zero padding of the H lanes stays exactly zero through relu.
    x_p = jnp.pad(x, ((0, S_pad - S), (0, B_pad - B), (0, 0)))
    w_ih_p = jnp.pad(weight_ih, ((0, H_pad - H), (0, 0)))
    bias_p = jnp.pad((bias_ih + bias_hh).astype(jnp.float32), ((0, H_pad - H),))
    xw = jnp.einsum("sbi,hi->sbh",
                    x_p.astype(compute_dtype), w_ih_p.astype(compute_dtype),
                    preferred_element_type=jnp.float32)
    xw = (xw + bias_p).astype(compute_dtype)   # streamed into the kernel

    # W_hh^T, zero padded; padded rows/cols are zero so padded lanes never leak.
    whh_t = jnp.pad(weight_hh, ((0, H_pad - H), (0, H_pad - H))).T
    whh_t = whh_t.astype(compute_dtype)

    grid_spec = pltpu.PrefetchScalarGridSpec(
        num_scalar_prefetch=0,
        grid=(n_bblk, n_chunks),
        in_specs=[
            # xw chunk: (T, Bblk, Hp); trailing dims are (8k, 128k)-aligned.
            pl.BlockSpec((T, batch_block, H_pad), lambda bi, c: (c, bi, 0)),
            # W_hh^T stays in HBM; copied once per batch block into VMEM scratch.
            pl.BlockSpec(memory_space=pl.ANY),
        ],
        out_specs=pl.BlockSpec((T, batch_block, H_pad), lambda bi, c: (c, bi, 0)),
        scratch_shapes=[
            pltpu.VMEM((H_pad, H_pad), compute_dtype),      # single-buffered W_hh^T
            pltpu.VMEM((batch_block, H_pad), jnp.float32),  # f32 h carry
        ],
    )

    out_pad = pl.pallas_call(
        functools.partial(_rnn_chunk_kernel, chunk=T, unroll=min(T, 8)),
        out_shape=jax.ShapeDtypeStruct((S_pad, B_pad, H_pad), out_dtype),
        grid_spec=grid_spec,
        compiler_params=pltpu.CompilerParams(
            # batch blocks are independent (megacore); time chunks are sequential.
            dimension_semantics=("parallel", "arbitrary"),
            vmem_limit_bytes=vmem_limit),
    )(xw, whh_t)

    out = out_pad[:S, :B, :H]
    hx = out[-1]          # final hidden state; no per-step hx store in the kernel
    return out, hx


def simple_rnn_ref(x, weight_ih, weight_hh, bias_ih, bias_hh):
    """Pure-JAX reference mirroring the PyTorch forward (relu, hx=None)."""
    _, B, _ = x.shape
    H = weight_ih.shape[0]
    h0 = jnp.zeros((B, H), dtype=jnp.float32)

    def step(h, x_t):
        h_new = jnp.maximum(
            x_t @ weight_ih.T + bias_ih + h @ weight_hh.T + bias_hh, 0.0)
        return h_new, h_new

    hx, out = jax.lax.scan(step, h0, x.astype(jnp.float32))
    return out.astype(x.dtype), hx.astype(x.dtype)


if __name__ == "__main__":
    # Small shapes consistent with the module's forward:
    # x: (seq_len, batch, input_size), hidden_size H.
    S, B, I, H = 8, 4, 16, 32

    key = jax.random.PRNGKey(0)
    kx, kwi, kwh, kbi, kbh = jax.random.split(key, 5)

    stdv = 1.0 / math.sqrt(H)   # matches reset_parameters()
    weight_ih = jax.random.uniform(kwi, (H, I), jnp.float32, -stdv, stdv)
    weight_hh = jax.random.uniform(kwh, (H, H), jnp.float32, -stdv, stdv)
    bias_ih = jax.random.uniform(kbi, (H,), jnp.float32, -stdv, stdv)
    bias_hh = jax.random.uniform(kbh, (H,), jnp.float32, -stdv, stdv)

    x = jax.random.normal(kx, (S, B, I), jnp.float32)

    out_ref, hx_ref = simple_rnn_ref(x, weight_ih, weight_hh, bias_ih, bias_hh)

    # Default mixed-precision path (bf16 matmul operands, f32 accumulate).
    out, hx = simple_rnn_pallas(x, weight_ih, weight_hh, bias_ih, bias_hh)
    out = jax.block_until_ready(out)
    hx = jax.block_until_ready(hx)
    assert out.shape == (S, B, H) and hx.shape == (B, H)
    assert jnp.allclose(out, out_ref, atol=3e-2, rtol=3e-2)
    assert jnp.allclose(hx, hx_ref, atol=3e-2, rtol=3e-2)

    # Full-f32 path for exact semantics.
    out32, hx32 = simple_rnn_pallas(x, weight_ih, weight_hh, bias_ih, bias_hh,
                                    compute_dtype=jnp.float32)
    out32 = jax.block_until_ready(out32)
    hx32 = jax.block_until_ready(hx32)
    assert jnp.allclose(out32, out_ref, atol=1e-5, rtol=1e-5)
    assert jnp.allclose(hx32, hx_ref, atol=1e-5, rtol=1e-5)

    print("KERNEL_OK")
</pallas_src>

<mosaic_0001>
module attributes {stable_mosaic.version = 11 : i64} {
  func.func @_rnn_chunk_kernel(%arg0: i32, %arg1: i32, %arg2: memref<8x8x128xbf16, #tpu.memory_space<vmem>>, %arg3: memref<128x128xbf16, #tpu.memory_space<any>>, %arg4: memref<8x8x128xf32, #tpu.memory_space<vmem>>, %arg5: memref<128x128xbf16, #tpu.memory_space<vmem>>, %arg6: memref<8x128xf32, #tpu.memory_space<vmem>>) attributes {dimension_semantics = [#tpu.dimension_semantics<parallel>, #tpu.dimension_semantics<arbitrary>], iteration_bounds = array<i64: 1, 1>, scalar_prefetch = 0 : i64, scratch_operands = 2 : i64, tpu.core_type = #tpu.core_type<tc>, window_params = [{transform_indices = @transform_0, window_bounds = array<i64: 8, 8, 128>}, {}, {transform_indices = @transform_2, window_bounds = array<i64: 8, 8, 128>}]} {
    %c0_i32 = arith.constant 0 : i32
    %0 = arith.cmpi eq, %arg1, %c0_i32 : i32
    %1 = arith.extui %0 : i1 to i32
    %c0_i32_0 = arith.constant 0 : i32
    %2 = arith.cmpi ne, %1, %c0_i32_0 : i32
    scf.if %2 {
      "tpu.region"() ({
        %112 = tpu.sem_alloc : memref<!tpu.dma_semaphore, #tpu.memory_space<semaphore_mem>>
        tpu.enqueue_dma source(%arg3 : memref<128x128xbf16, #tpu.memory_space<any>>) target(%arg5 : memref<128x128xbf16, #tpu.memory_space<vmem>>) target_semaphore(%112 : memref<!tpu.dma_semaphore, #tpu.memory_space<semaphore_mem>>)
        tpu.wait_dma2 semaphore(%112 : memref<!tpu.dma_semaphore, #tpu.memory_space<semaphore_mem>>) src(%arg3 : memref<128x128xbf16, #tpu.memory_space<any>>) dst(%arg5 : memref<128x128xbf16, #tpu.memory_space<vmem>>)
        tpu.yield
      }) : () -> ()
      %cst_54 = arith.constant 0.000000e+00 : f32
      %110 = vector.broadcast %cst_54 : f32 to vector<8x128xf32>
      %c0_55 = arith.constant 0 : index
      %c0_56 = arith.constant 0 : index
      %111 = vector.load %arg6[%c0_55, %c0_56] : memref<8x128xf32, #tpu.memory_space<vmem>>, vector<8x128xf32>
      tpu.vector_store %arg6[%c0_55, %c0_56], %110 {strides = array<i32>} : memref<8x128xf32, #tpu.memory_space<vmem>>, vector<8x128xf32>,
    } else {
    }
    %c0 = arith.constant 0 : index
    %c0_1 = arith.constant 0 : index
    %3 = vector.load %arg5[%c0, %c0_1] : memref<128x128xbf16, #tpu.memory_space<vmem>>, vector<128x128xbf16>
    %c0_2 = arith.constant 0 : index
    %c0_3 = arith.constant 0 : index
    %4 = vector.load %arg6[%c0_2, %c0_3] : memref<8x128xf32, #tpu.memory_space<vmem>>, vector<8x128xf32>
    %c0_i32_4 = arith.constant 0 : i32
    %5 = arith.index_cast %c0_i32_4 : i32 to index
    %c0_5 = arith.constant 0 : index
    %c0_6 = arith.constant 0 : index
    %6 = vector.load %arg2[%5, %c0_5, %c0_6] : memref<8x8x128xbf16, #tpu.memory_space<vmem>>, vector<1x8x128xbf16>
    %7 = vector.shape_cast %6 : vector<1x8x128xbf16> to vector<8x128xbf16>
    %8 = arith.extf %7 : vector<8x128xbf16> to vector<8x128xf32>
    %9 = arith.truncf %4 : vector<8x128xf32> to vector<8x128xbf16>
    %cst = arith.constant dense<0.000000e+00> : vector<8x128xf32>
    %10 = tpu.matmul %9, %3, %cst {dimension_numbers = #tpu.dot_dimension_numbers<[1], [0], [0], [1], [0, 0, 1, 1], [], []>} : vector<8x128xbf16>, vector<128x128xbf16>, vector<8x128xf32> -> vector<8x128xf32>
    %11 = arith.addf %8, %10 : vector<8x128xf32>
    %cst_7 = arith.constant 0.000000e+00 : f32
    %12 = vector.broadcast %cst_7 : f32 to vector<8x128xf32>
    %13 = arith.maximumf %11, %12 : vector<8x128xf32>
    %14 = arith.index_cast %c0_i32_4 : i32 to index
    %c0_8 = arith.constant 0 : index
    %c0_9 = arith.constant 0 : index
    %15 = vector.load %arg4[%14, %c0_8, %c0_9] : memref<8x8x128xf32, #tpu.memory_space<vmem>>, vector<1x8x128xf32>
    %16 = vector.shape_cast %15 : vector<1x8x128xf32> to vector<8x128xf32>
    %17 = vector.shape_cast %13 : vector<8x128xf32> to vector<1x8x128xf32>
    tpu.vector_store %arg4[%14, %c0_8, %c0_9], %17 {strides = array<i32>} : memref<8x8x128xf32, #tpu.memory_space<vmem>>, vector<1x8x128xf32>,
    %c1_i32 = arith.constant 1 : i32
    %18 = arith.index_cast %c1_i32 : i32 to index
    %c0_10 = arith.constant 0 : index
    %c0_11 = arith.constant 0 : index
    %19 = vector.load %arg2[%18, %c0_10, %c0_11] : memref<8x8x128xbf16, #tpu.memory_space<vmem>>, vector<1x8x128xbf16>
    %20 = vector.shape_cast %19 : vector<1x8x128xbf16> to vector<8x128xbf16>
    %21 = arith.extf %20 : vector<8x128xbf16> to vector<8x128xf32>
    %22 = arith.truncf %13 : vector<8x128xf32> to vector<8x128xbf16>
    %cst_12 = arith.constant dense<0.000000e+00> : vector<8x128xf32>
    %23 = tpu.matmul %22, %3, %cst_12 {dimension_numbers = #tpu.dot_dimension_numbers<[1], [0], [0], [1], [0, 0, 1, 1], [], []>} : vector<8x128xbf16>, vector<128x128xbf16>, vector<8x128xf32> -> vector<8x128xf32>
    %24 = arith.addf %21, %23 : vector<8x128xf32>
    %cst_13 = arith.constant 0.000000e+00 : f32
    %25 = vector.broadcast %cst_13 : f32 to vector<8x128xf32>
    %26 = arith.maximumf %24, %25 : vector<8x128xf32>
    %27 = arith.index_cast %c1_i32 : i32 to index
    %c0_14 = arith.constant 0 : index
    %c0_15 = arith.constant 0 : index
    %28 = vector.load %arg4[%27, %c0_14, %c0_15] : memref<8x8x128xf32, #tpu.memory_space<vmem>>, vector<1x8x128xf32>
    %29 = vector.shape_cast %28 : vector<1x8x128xf32> to vector<8x128xf32>
    %30 = vector.shape_cast %26 : vector<8x128xf32> to vector<1x8x128xf32>
    tpu.vector_store %arg4[%27, %c0_14, %c0_15], %30 {strides = array<i32>} : memref<8x8x128xf32, #tpu.memory_space<vmem>>, vector<1x8x128xf32>,
    %c2_i32 = arith.constant 2 : i32
    %31 = arith.index_cast %c2_i32 : i32 to index
    %c0_16 = arith.constant 0 : index
    %c0_17 = arith.constant 0 : index
    %32 = vector.load %arg2[%31, %c0_16, %c0_17] : memref<8x8x128xbf16, #tpu.memory_space<vmem>>, vector<1x8x128xbf16>
    %33 = vector.shape_cast %32 : vector<1x8x128xbf16> to vector<8x128xbf16>
    %34 = arith.extf %33 : vector<8x128xbf16> to vector<8x128xf32>
    %35 = arith.truncf %26 : vector<8x128xf32> to vector<8x128xbf16>
    %cst_18 = arith.constant dense<0.000000e+00> : vector<8x128xf32>
    %36 = tpu.matmul %35, %3, %cst_18 {dimension_numbers = #tpu.dot_dimension_numbers<[1], [0], [0], [1], [0, 0, 1, 1], [], []>} : vector<8x128xbf16>, vector<128x128xbf16>, vector<8x128xf32> -> vector<8x128xf32>
    %37 = arith.addf %34, %36 : vector<8x128xf32>
    %cst_19 = arith.constant 0.000000e+00 : f32
    %38 = vector.broadcast %cst_19 : f32 to vector<8x128xf32>
    %39 = arith.maximumf %37, %38 : vector<8x128xf32>
    %40 = arith.index_cast %c2_i32 : i32 to index
    %c0_20 = arith.constant 0 : index
    %c0_21 = arith.constant 0 : index
    %41 = vector.load %arg4[%40, %c0_20, %c0_21] : memref<8x8x128xf32, #tpu.memory_space<vmem>>, vector<1x8x128xf32>
    %42 = vector.shape_cast %41 : vector<1x8x128xf32> to vector<8x128xf32>
    %43 = vector.shape_cast %39 : vector<8x128xf32> to vector<1x8x128xf32>
    tpu.vector_store %arg4[%40, %c0_20, %c0_21], %43 {strides = array<i32>} : memref<8x8x128xf32, #tpu.memory_space<vmem>>, vector<1x8x128xf32>,
    %c3_i32 = arith.constant 3 : i32
    %44 = arith.index_cast %c3_i32 : i32 to index
    %c0_22 = arith.constant 0 : index
    %c0_23 = arith.constant 0 : index
    %45 = vector.load %arg2[%44, %c0_22, %c0_23] : memref<8x8x128xbf16, #tpu.memory_space<vmem>>, vector<1x8x128xbf16>
    %46 = vector.shape_cast %45 : vector<1x8x128xbf16> to vector<8x128xbf16>
    %47 = arith.extf %46 : vector<8x128xbf16> to vector<8x128xf32>
    %48 = arith.truncf %39 : vector<8x128xf32> to vector<8x128xbf16>
    %cst_24 = arith.constant dense<0.000000e+00> : vector<8x128xf32>
    %49 = tpu.matmul %48, %3, %cst_24 {dimension_numbers = #tpu.dot_dimension_numbers<[1], [0], [0], [1], [0, 0, 1, 1], [], []>} : vector<8x128xbf16>, vector<128x128xbf16>, vector<8x128xf32> -> vector<8x128xf32>
    %50 = arith.addf %47, %49 : vector<8x128xf32>
    %cst_25 = arith.constant 0.000000e+00 : f32
    %51 = vector.broadcast %cst_25 : f32 to vector<8x128xf32>
    %52 = arith.maximumf %50, %51 : vector<8x128xf32>
    %53 = arith.index_cast %c3_i32 : i32 to index
    %c0_26 = arith.constant 0 : index
    %c0_27 = arith.constant 0 : index
    %54 = vector.load %arg4[%53, %c0_26, %c0_27] : memref<8x8x128xf32, #tpu.memory_space<vmem>>, vector<1x8x128xf32>
    %55 = vector.shape_cast %54 : vector<1x8x128xf32> to vector<8x128xf32>
    %56 = vector.shape_cast %52 : vector<8x128xf32> to vector<1x8x128xf32>
    tpu.vector_store %arg4[%53, %c0_26, %c0_27], %56 {strides = array<i32>} : memref<8x8x128xf32, #tpu.memory_space<vmem>>, vector<1x8x128xf32>,
    %c4_i32 = arith.constant 4 : i32
    %57 = arith.index_cast %c4_i32 : i32 to index
    %c0_28 = arith.constant 0 : index
    %c0_29 = arith.constant 0 : index
    %58 = vector.load %arg2[%57, %c0_28, %c0_29] : memref<8x8x128xbf16, #tpu.memory_space<vmem>>, vector<1x8x128xbf16>
    %59 = vector.shape_cast %58 : vector<1x8x128xbf16> to vector<8x128xbf16>
    %60 = arith.extf %59 : vector<8x128xbf16> to vector<8x128xf32>
    %61 = arith.truncf %52 : vector<8x128xf32> to vector<8x128xbf16>
    %cst_30 = arith.constant dense<0.000000e+00> : vector<8x128xf32>
    %62 = tpu.matmul %61, %3, %cst_30 {dimension_numbers = #tpu.dot_dimension_numbers<[1], [0], [0], [1], [0, 0, 1, 1], [], []>} : vector<8x128xbf16>, vector<128x128xbf16>, vector<8x128xf32> -> vector<8x128xf32>
    %63 = arith.addf %60, %62 : vector<8x128xf32>
    %cst_31 = arith.constant 0.000000e+00 : f32
    %64 = vector.broadcast %cst_31 : f32 to vector<8x128xf32>
    %65 = arith.maximumf %63, %64 : vector<8x128xf32>
    %66 = arith.index_cast %c4_i32 : i32 to index
    %c0_32 = arith.constant 0 : index
    %c0_33 = arith.constant 0 : index
    %67 = vector.load %arg4[%66, %c0_32, %c0_33] : memref<8x8x128xf32, #tpu.memory_space<vmem>>, vector<1x8x128xf32>
    %68 = vector.shape_cast %67 : vector<1x8x128xf32> to vector<8x128xf32>
    %69 = vector.shape_cast %65 : vector<8x128xf32> to vector<1x8x128xf32>
    tpu.vector_store %arg4[%66, %c0_32, %c0_33], %69 {strides = array<i32>} : memref<8x8x128xf32, #tpu.memory_space<vmem>>, vector<1x8x128xf32>,
    %c5_i32 = arith.constant 5 : i32
    %70 = arith.index_cast %c5_i32 : i32 to index
    %c0_34 = arith.constant 0 : index
    %c0_35 = arith.constant 0 : index
    %71 = vector.load %arg2[%70, %c0_34, %c0_35] : memref<8x8x128xbf16, #tpu.memory_space<vmem>>, vector<1x8x128xbf16>
    %72 = vector.shape_cast %71 : vector<1x8x128xbf16> to vector<8x128xbf16>
    %73 = arith.extf %72 : vector<8x128xbf16> to vector<8x128xf32>
    %74 = arith.truncf %65 : vector<8x128xf32> to vector<8x128xbf16>
    %cst_36 = arith.constant dense<0.000000e+00> : vector<8x128xf32>
    %75 = tpu.matmul %74, %3, %cst_36 {dimension_numbers = #tpu.dot_dimension_numbers<[1], [0], [0], [1], [0, 0, 1, 1], [], []>} : vector<8x128xbf16>, vector<128x128xbf16>, vector<8x128xf32> -> vector<8x128xf32>
    %76 = arith.addf %73, %75 : vector<8x128xf32>
    %cst_37 = arith.constant 0.000000e+00 : f32
    %77 = vector.broadcast %cst_37 : f32 to vector<8x128xf32>
    %78 = arith.maximumf %76, %77 : vector<8x128xf32>
    %79 = arith.index_cast %c5_i32 : i32 to index
    %c0_38 = arith.constant 0 : index
    %c0_39 = arith.constant 0 : index
    %80 = vector.load %arg4[%79, %c0_38, %c0_39] : memref<8x8x128xf32, #tpu.memory_space<vmem>>, vector<1x8x128xf32>
    %81 = vector.shape_cast %80 : vector<1x8x128xf32> to vector<8x128xf32>
    %82 = vector.shape_cast %78 : vector<8x128xf32> to vector<1x8x128xf32>
    tpu.vector_store %arg4[%79, %c0_38, %c0_39], %82 {strides = array<i32>} : memref<8x8x128xf32, #tpu.memory_space<vmem>>, vector<1x8x128xf32>,
    %c6_i32 = arith.constant 6 : i32
    %83 = arith.index_cast %c6_i32 : i32 to index
    %c0_40 = arith.constant 0 : index
    %c0_41 = arith.constant 0 : index
    %84 = vector.load %arg2[%83, %c0_40, %c0_41] : memref<8x8x128xbf16, #tpu.memory_space<vmem>>, vector<1x8x128xbf16>
    %85 = vector.shape_cast %84 : vector<1x8x128xbf16> to vector<8x128xbf16>
    %86 = arith.extf %85 : vector<8x128xbf16> to vector<8x128xf32>
    %87 = arith.truncf %78 : vector<8x128xf32> to vector<8x128xbf16>
    %cst_42 = arith.constant dense<0.000000e+00> : vector<8x128xf32>
    %88 = tpu.matmul %87, %3, %cst_42 {dimension_numbers = #tpu.dot_dimension_numbers<[1], [0], [0], [1], [0, 0, 1, 1], [], []>} : vector<8x128xbf16>, vector<128x128xbf16>, vector<8x128xf32> -> vector<8x128xf32>
    %89 = arith.addf %86, %88 : vector<8x128xf32>
    %cst_43 = arith.constant 0.000000e+00 : f32
    %90 = vector.broadcast %cst_43 : f32 to vector<8x128xf32>
    %91 = arith.maximumf %89, %90 : vector<8x128xf32>
    %92 = arith.index_cast %c6_i32 : i32 to index
    %c0_44 = arith.constant 0 : index
    %c0_45 = arith.constant 0 : index
    %93 = vector.load %arg4[%92, %c0_44, %c0_45] : memref<8x8x128xf32, #tpu.memory_space<vmem>>, vector<1x8x128xf32>
    %94 = vector.shape_cast %93 : vector<1x8x128xf32> to vector<8x128xf32>
    %95 = vector.shape_cast %91 : vector<8x128xf32> to vector<1x8x128xf32>
    tpu.vector_store %arg4[%92, %c0_44, %c0_45], %95 {strides = array<i32>} : memref<8x8x128xf32, #tpu.memory_space<vmem>>, vector<1x8x128xf32>,
    %c7_i32 = arith.constant 7 : i32
    %96 = arith.index_cast %c7_i32 : i32 to index
    %c0_46 = arith.constant 0 : index
    %c0_47 = arith.constant 0 : index
    %97 = vector.load %arg2[%96, %c0_46, %c0_47] : memref<8x8x128xbf16, #tpu.memory_space<vmem>>, vector<1x8x128xbf16>
    %98 = vector.shape_cast %97 : vector<1x8x128xbf16> to vector<8x128xbf16>
    %99 = arith.extf %98 : vector<8x128xbf16> to vector<8x128xf32>
    %100 = arith.truncf %91 : vector<8x128xf32> to vector<8x128xbf16>
    %cst_48 = arith.constant dense<0.000000e+00> : vector<8x128xf32>
    %101 = tpu.matmul %100, %3, %cst_48 {dimension_numbers = #tpu.dot_dimension_numbers<[1], [0], [0], [1], [0, 0, 1, 1], [], []>} : vector<8x128xbf16>, vector<128x128xbf16>, vector<8x128xf32> -> vector<8x128xf32>
    %102 = arith.addf %99, %101 : vector<8x128xf32>
    %cst_49 = arith.constant 0.000000e+00 : f32
    %103 = vector.broadcast %cst_49 : f32 to vector<8x128xf32>
    %104 = arith.maximumf %102, %103 : vector<8x128xf32>
    %105 = arith.index_cast %c7_i32 : i32 to index
    %c0_50 = arith.constant 0 : index
    %c0_51 = arith.constant 0 : index
    %106 = vector.load %arg4[%105, %c0_50, %c0_51] : memref<8x8x128xf32, #tpu.memory_space<vmem>>, vector<1x8x128xf32>
    %107 = vector.shape_cast %106 : vector<1x8x128xf32> to vector<8x128xf32>
    %108 = vector.shape_cast %104 : vector<8x128xf32> to vector<1x8x128xf32>
    tpu.vector_store %arg4[%105, %c0_50, %c0_51], %108 {strides = array<i32>} : memref<8x8x128xf32, #tpu.memory_space<vmem>>, vector<1x8x128xf32>,
    %c8_i32 = arith.constant 8 : i32
    %c0_52 = arith.constant 0 : index
    %c0_53 = arith.constant 0 : index
    %109 = vector.load %arg6[%c0_52, %c0_53] : memref<8x128xf32, #tpu.memory_space<vmem>>, vector<8x128xf32>
    tpu.vector_store %arg6[%c0_52, %c0_53], %104 {strides = array<i32>} : memref<8x128xf32, #tpu.memory_space<vmem>>, vector<8x128xf32>,
    return
  }
  func.func @transform_0(%arg0: i32, %arg1: i32) -> (i32, i32, i32) {
    %c0_i32 = arith.constant 0 : i32
    %c0_i32_0 = arith.constant 0 : i32
    return %arg1, %arg0, %c0_i32 : i32, i32, i32
  }
  func.func @transform_2(%arg0: i32, %arg1: i32) -> (i32, i32, i32) {
    %c0_i32 = arith.constant 0 : i32
    %c0_i32_0 = arith.constant 0 : i32
    return %arg1, %arg0, %c0_i32 : i32, i32, i32
  }
}

</mosaic_0001>

<llo_original>
// kernel: simple_rnn_pallas.1
$region0: #{simple_rnn_pallas.1}
  #allocation0 [shape = 'u32[]', space=smem, size = 0x4, offset = 0x4, fixed_abs, tag = 'smem constant byte address 0x4 - core index']
  #allocation1 [shape = 'u32[144,128]{1,0:T(1,128)}', space=vmem, size = 0x12000, scoped, tag = 'internal scratch']
  #allocation2 [shape = 'bf16[128,128]{1,0:T(16,128)(2,1)}', space=vmem, size = 0x8000, scoped, tag = 'scratch operand']
  #allocation3 [shape = 'f32[8,128]{1,0:T(8,128)}', space=vmem, size = 0x1000, scoped, tag = 'scratch operand']
  #allocation5 [shape = 's32[]', space=sflag, size = 0x4, offset = 0, fixed_abs, tag = 'sflag constant byte address 0x0 - dummy sync flag']
  %s0 = inlined_call_operand.vmem [shape: bf16[8,8,128], index: 0, kind: input, shape index: {}]
  %s1 = inlined_call_operand.vmem [shape: bf16[128,128], index: 1, kind: input, shape index: {}]
  %s2 = inlined_call_operand.vmem [shape: f32[8,8,128], index: 2, kind: output, shape index: {}]
  %s3 = sld [smem:[#allocation0]]
  $region53: #{simple_rnn_pallas.1} parent=0
    _
  %s5 = ssub.s32 1, %s3
  %s6 = scalar_select 0, %s5, %s3
  // Predicated region
  $region2: #{simple_rnn_pallas.1} parent=0 // pred_check
    _
  $region3: #{simple_rnn_pallas.1} parent=0 // pred_check_branch
    %8 = sbr.rel (0) target = $region5
  $region4: #{simple_rnn_pallas.1} parent=0 // pred_region
    _
  $region5: #{simple_rnn_pallas.1} parent=0 // pred_fallthru
    _
  %p10 = scmp.eq.s32.totalorder 0, 0
  // Predicated region
  $region6: #{simple_rnn_pallas.1} parent=0 // pred_check
    %p11 = pneg %p10
  $region7: #{simple_rnn_pallas.1} parent=0 // pred_check_branch
    %13 = sbr.rel (%p11) target = $region9
  $region8: #{simple_rnn_pallas.1} parent=0 // pred_region
    $region10: #{simple_rnn_pallas.1} parent=8
      #allocation4 [shape = 's32[1]{0}', space=sflag, size = 0x4, scoped, tag = 'scoped memory for simple_rnn_pallas.1']
      %p15 = scmp.lt.u32.totalorder 64, 8
      %p16 = pneg %p15
      // Predicated region
      $region11: #{simple_rnn_pallas.1} parent=10 // pred_check
        _
      $region12: #{simple_rnn_pallas.1} parent=10 // pred_check_branch
        %18 = sbr.rel (%p15) target = $region14
      $region13: #{simple_rnn_pallas.1} parent=10 // pred_region
        %s33 = sand.u32 64, 7
        %p34 = scmp.eq.s32.totalorder %s33, 0
        // Predicated region
        $region26: #{simple_rnn_pallas.1} parent=13 // pred_check
          %p35 = pneg %p34
        $region27: #{simple_rnn_pallas.1} parent=13 // pred_check_branch
          %37 = sbr.rel (%p35) target = $region29
        $region28: #{simple_rnn_pallas.1} parent=13 // pred_region
          loop: start=0, step=1, limit=1
          $region30: #{simple_rnn_pallas.1} parent=28 // loop_pre_header
            _
          $region31: #{simple_rnn_pallas.1} parent=28 // loop_header
            %s39 = sphi 0, %s43
            %p40 = scmp.ge.s32.totalorder %s39, 1
            %s44 = sphi %s1, %s1
            %s45 = sphi [#allocation2], [#allocation2]
          $region32: #{simple_rnn_pallas.1} parent=28 // loop_header_branch
            %42 = sbr.rel (%p40) target = $region36
          $region33: #{simple_rnn_pallas.1} parent=28 // loop_body
            %v46 = vld [vmem:[%s44] sm:$0xff]
            %47 = vst [vmem:[%s45] sm:$0xff] %v46
            %v48 = vld [vmem:[%s44 + $0x8] sm:$0xff]
            %49 = vst [vmem:[%s45 + $0x8] sm:$0xff] %v48
            %v50 = vld [vmem:[%s44 + $0x10] sm:$0xff]
            %51 = vst [vmem:[%s45 + $0x10] sm:$0xff] %v50
            %v52 = vld [vmem:[%s44 + $0x18] sm:$0xff]
            %53 = vst [vmem:[%s45 + $0x18] sm:$0xff] %v52
            %v54 = vld [vmem:[%s44 + $0x20] sm:$0xff]
            %55 = vst [vmem:[%s45 + $0x20] sm:$0xff] %v54
            %v56 = vld [vmem:[%s44 + $0x28] sm:$0xff]
            %57 = vst [vmem:[%s45 + $0x28] sm:$0xff] %v56
            %v58 = vld [vmem:[%s44 + $0x30] sm:$0xff]
            %59 = vst [vmem:[%s45 + $0x30] sm:$0xff] %v58
            %v60 = vld [vmem:[%s44 + $0x38] sm:$0xff]
            %61 = vst [vmem:[%s45 + $0x38] sm:$0xff] %v60
          $region34: #{simple_rnn_pallas.1} parent=28 // loop_footer
            %s43 = sadd.s32 1, %s39
          $region35: #{simple_rnn_pallas.1} parent=28 // loop_footer_branch
            %38 = sbr.rel target = $region31
          $region36: #{simple_rnn_pallas.1} parent=28 // loop_exit
            _
        $region29: #{simple_rnn_pallas.1} parent=13 // pred_fallthru
          _
        %p62 = pneg %p34
        // Predicated region
        $region37: #{simple_rnn_pallas.1} parent=13 // pred_check
          _
        $region38: #{simple_rnn_pallas.1} parent=13 // pred_check_branch
          %64 = sbr.rel (%p34) target = $region40
        $region39: #{simple_rnn_pallas.1} parent=13 // pred_region
          %s65 = sand.u32 64, 7
        $region40: #{simple_rnn_pallas.1} parent=13 // pred_fallthru
          _
      $region14: #{simple_rnn_pallas.1} parent=10 // pred_fallthru
        _
      // Predicated region
      $region15: #{simple_rnn_pallas.1} parent=10 // pred_check
        %p19 = pneg %p15
      $region16: #{simple_rnn_pallas.1} parent=10 // pred_check_branch
        %21 = sbr.rel (%p19) target = $region18
      $region17: #{simple_rnn_pallas.1} parent=10 // pred_region
        %s22 = sshllo.u32 0, 64
        loop: start=0, step=1, limit=1
        $region19: #{simple_rnn_pallas.1} parent=17 // loop_pre_header
          _
        $region20: #{simple_rnn_pallas.1} parent=17 // loop_header
          %s24 = sphi 0, %s28
          %p25 = scmp.ge.s32.totalorder %s24, 1
          %s29 = sphi %s1, %s1
          %s30 = sphi [#allocation2], [#allocation2]
        $region21: #{simple_rnn_pallas.1} parent=17 // loop_header_branch
          %27 = sbr.rel (%p25) target = $region25
        $region22: #{simple_rnn_pallas.1} parent=17 // loop_body
          %v31 = vld [vmem:[%s29] sm:%s22]
          %32 = vst [vmem:[%s30] sm:%s22] %v31
        $region23: #{simple_rnn_pallas.1} parent=17 // loop_footer
          %s28 = sadd.s32 1, %s24
        $region24: #{simple_rnn_pallas.1} parent=17 // loop_footer_branch
          %23 = sbr.rel target = $region20
        $region25: #{simple_rnn_pallas.1} parent=17 // loop_exit
          _
      $region18: #{simple_rnn_pallas.1} parent=10 // pred_fallthru
        _
      // Predicated region
      $region41: #{simple_rnn_pallas.1} parent=10 // pred_check
        _
      $region42: #{simple_rnn_pallas.1} parent=10 // pred_check_branch
        %68 = sbr.rel (0) target = $region44
      $region43: #{simple_rnn_pallas.1} parent=10 // pred_region
        %69 = vsyncadd [#allocation4], 1024
      $region44: #{simple_rnn_pallas.1} parent=10 // pred_fallthru
        _
      %s70 = smul.u32 4, 16
      %s71 = smul.u32 %s70, 1
      %s72 = sshll.u32 %s71, 4
      %73 = dma.done [#allocation4], %s72
    %74 = vst [vmem:[#allocation3] sm:$0xff] 0.0
  $region9: #{simple_rnn_pallas.1} parent=0 // pred_fallthru
    _
  %v75 = vld [vmem:[#allocation2] sm:$0xff]
  %v76 = vld [vmem:[#allocation2 + $0x8] sm:$0xff]
  %v77 = vld [vmem:[#allocation2 + $0x10] sm:$0xff]
  %v78 = vld [vmem:[#allocation2 + $0x18] sm:$0xff]
  %v79 = vld [vmem:[#allocation2 + $0x20] sm:$0xff]
  %v80 = vld [vmem:[#allocation2 + $0x28] sm:$0xff]
  %v81 = vld [vmem:[#allocation2 + $0x30] sm:$0xff]
  %v82 = vld [vmem:[#allocation2 + $0x38] sm:$0xff]
  %v83 = vld [vmem:[#allocation3] sm:$0xff]
  %v84 = vld [vmem:[%s0] sm:$0xf]
  %v85 = vunpack.c.l.bf16 %v84
  %v86 = vpack.c.bf16 %v83, %v83
  %87 = vmatprep.subr.bf16.mxu0 0
  %88 = vmatpush1.bf16.msra.mxu0 %v75
  %89 = vmatprep.subr.bf16.mxu0 0
  %90 = vmatpush1.bf16.msra.mxu0 %v76
  %91 = vmatprep.subr.bf16.mxu0 0
  %92 = vmatpush1.bf16.msra.mxu0 %v77
  %93 = vmatprep.subr.bf16.mxu0 0
  %94 = vmatpush1.bf16.msra.mxu0 %v78
  %95 = vmatprep.subr.bf16.mxu0 0
  %96 = vmatpush1.bf16.msra.mxu0 %v79
  %97 = vmatprep.subr.bf16.mxu0 0
  %98 = vmatpush1.bf16.msra.mxu0 %v80
  %99 = vmatprep.subr.bf16.mxu0 0
  %100 = vmatpush1.bf16.msra.mxu0 %v81
  %101 = vmatprep.subr.bf16.mxu0 0
  %102 = vmatpush1.bf16.msra.mxu0 %v82
  %103 = vmatprep.subr.bf16.mxu0 0
  %104 = vmatpush1.bf16.msra.mxu0 0
  %105 = vmatprep.subr.bf16.mxu0 0
  %106 = vmatpush1.bf16.msra.mxu0 0
  %107 = vmatprep.subr.bf16.mxu0 0
  %108 = vmatpush1.bf16.msra.mxu0 0
  %109 = vmatprep.subr.bf16.mxu0 0
  %110 = vmatpush1.bf16.msra.mxu0 0
  %111 = vmatprep.subr.bf16.mxu0 0
  %112 = vmatpush1.bf16.msra.mxu0 0
  %113 = vmatprep.subr.bf16.mxu0 0
  %114 = vmatpush1.bf16.msra.mxu0 0
  %115 = vmatprep.subr.bf16.mxu0 0
  %116 = vmatpush1.bf16.msra.mxu0 0
  %117 = vmatprep.subr.bf16.mxu0 0
  %118 = vmatpush1.bf16.msra.mxu0 0
  %119 = vmatprep.mubr.bf16.mxu0 0
  %120 = vmatmul.mubr.bf16.gmra.mrb[0].mxu0 %v86
  %v121 = vpop.f32.mrb[0].mxu0
  %v122 = vadd.f32 0.0, %v121
  %v123 = vpop.f32.mrb[0].mxu0
  %v124 = vpop.f32.mrb[0].mxu0
  %v125 = vpop.f32.mrb[0].mxu0
  %126 = vdwg.mxu0
  %v127 = vadd.f32 %v85, %v122
  %v128 = vmax.f32 %v127, 0.0
  %129 = vst [vmem:[%s2] sm:$0xff] %v128
  %s130 = scalar_lea.vmem %s0, 4
  %v131 = vld [vmem:[%s130] sm:$0xf]
  %v132 = vunpack.c.l.bf16 %v131
  %v133 = vpack.c.bf16 %v128, %v128
  %134 = vmatprep.subr.bf16.mxu0 0
  %135 = vmatpush1.bf16.msra.mxu0 %v75
  %136 = vmatprep.subr.bf16.mxu0 0
  %137 = vmatpush1.bf16.msra.mxu0 %v76
  %138 = vmatprep.subr.bf16.mxu0 0
  %139 = vmatpush1.bf16.msra.mxu0 %v77
  %140 = vmatprep.subr.bf16.mxu0 0
  %141 = vmatpush1.bf16.msra.mxu0 %v78
  %142 = vmatprep.subr.bf16.mxu0 0
  %143 = vmatpush1.bf16.msra.mxu0 %v79
  %144 = vmatprep.subr.bf16.mxu0 0
  %145 = vmatpush1.bf16.msra.mxu0 %v80
  %146 = vmatprep.subr.bf16.mxu0 0
  %147 = vmatpush1.bf16.msra.mxu0 %v81
  %148 = vmatprep.subr.bf16.mxu0 0
  %149 = vmatpush1.bf16.msra.mxu0 %v82
  %150 = vmatprep.subr.bf16.mxu0 0
  %151 = vmatpush1.bf16.msra.mxu0 0
  %152 = vmatprep.subr.bf16.mxu0 0
  %153 = vmatpush1.bf16.msra.mxu0 0
  %154 = vmatprep.subr.bf16.mxu0 0
  %155 = vmatpush1.bf16.msra.mxu0 0
  %156 = vmatprep.subr.bf16.mxu0 0
  %157 = vmatpush1.bf16.msra.mxu0 0
  %158 = vmatprep.subr.bf16.mxu0 0
  %159 = vmatpush1.bf16.msra.mxu0 0
  %160 = vmatprep.subr.bf16.mxu0 0
  %161 = vmatpush1.bf16.msra.mxu0 0
  %162 = vmatprep.subr.bf16.mxu0 0
  %163 = vmatpush1.bf16.msra.mxu0 0
  %164 = vmatprep.subr.bf16.mxu0 0
  %165 = vmatpush1.bf16.msra.mxu0 0
  %166 = vmatprep.mubr.bf16.mxu0 0
  %167 = vmatmul.mubr.bf16.gmra.mrb[0].mxu0 %v133
  %v168 = vpop.f32.mrb[0].mxu0
  %v169 = vadd.f32 0.0, %v168
  %v170 = vpop.f32.mrb[0].mxu0
  %v171 = vpop.f32.mrb[0].mxu0
  %v172 = vpop.f32.mrb[0].mxu0
  %173 = vdwg.mxu0
  %v174 = vadd.f32 %v132, %v169
  %v175 = vmax.f32 %v174, 0.0
  %s176 = scalar_lea.vmem %s2, 8
  %177 = vst [vmem:[%s176] sm:$0xff] %v175
  %s178 = scalar_lea.vmem %s0, 8
  %v179 = vld [vmem:[%s178] sm:$0xf]
  %v180 = vunpack.c.l.bf16 %v179
  %v181 = vpack.c.bf16 %v175, %v175
  %182 = vmatprep.subr.bf16.mxu0 0
  %183 = vmatpush1.bf16.msra.mxu0 %v75
  %184 = vmatprep.subr.bf16.mxu0 0
  %185 = vmatpush1.bf16.msra.mxu0 %v76
  %186 = vmatprep.subr.bf16.mxu0 0
  %187 = vmatpush1.bf16.msra.mxu0 %v77
  %188 = vmatprep.subr.bf16.mxu0 0
  %189 = vmatpush1.bf16.msra.mxu0 %v78
  %190 = vmatprep.subr.bf16.mxu0 0
  %191 = vmatpush1.bf16.msra.mxu0 %v79
  %192 = vmatprep.subr.bf16.mxu0 0
  %193 = vmatpush1.bf16.msra.mxu0 %v80
  %194 = vmatprep.subr.bf16.mxu0 0
  %195 = vmatpush1.bf16.msra.mxu0 %v81
  %196 = vmatprep.subr.bf16.mxu0 0
  %197 = vmatpush1.bf16.msra.mxu0 %v82
  %198 = vmatprep.subr.bf16.mxu0 0
  %199 = vmatpush1.bf16.msra.mxu0 0
  %200 = vmatprep.subr.bf16.mxu0 0
  %201 = vmatpush1.bf16.msra.mxu0 0
  %202 = vmatprep.subr.bf16.mxu0 0
  %203 = vmatpush1.bf16.msra.mxu0 0
  %204 = vmatprep.subr.bf16.mxu0 0
  %205 = vmatpush1.bf16.msra.mxu0 0
  %206 = vmatprep.subr.bf16.mxu0 0
  %207 = vmatpush1.bf16.msra.mxu0 0
  %208 = vmatprep.subr.bf16.mxu0 0
  %209 = vmatpush1.bf16.msra.mxu0 0
  %210 = vmatprep.subr.bf16.mxu0 0
  %211 = vmatpush1.bf16.msra.mxu0 0
  %212 = vmatprep.subr.bf16.mxu0 0
  %213 = vmatpush1.bf16.msra.mxu0 0
  %214 = vmatprep.mubr.bf16.mxu0 0
  %215 = vmatmul.mubr.bf16.gmra.mrb[0].mxu0 %v181
  %v216 = vpop.f32.mrb[0].mxu0
  %v217 = vadd.f32 0.0, %v216
  %v218 = vpop.f32.mrb[0].mxu0
  %v219 = vpop.f32.mrb[0].mxu0
  %v220 = vpop.f32.mrb[0].mxu0
  %221 = vdwg.mxu0
  %v222 = vadd.f32 %v180, %v217
  %v223 = vmax.f32 %v222, 0.0
  %s224 = scalar_lea.vmem %s2, 16
  %225 = vst [vmem:[%s224] sm:$0xff] %v223
  %s226 = scalar_lea.vmem %s0, 12
  %v227 = vld [vmem:[%s226] sm:$0xf]
  %v228 = vunpack.c.l.bf16 %v227
  %v229 = vpack.c.bf16 %v223, %v223
  %230 = vmatprep.subr.bf16.mxu0 0
  %231 = vmatpush1.bf16.msra.mxu0 %v75
  %232 = vmatprep.subr.bf16.mxu0 0
  %233 = vmatpush1.bf16.msra.mxu0 %v76
  %234 = vmatprep.subr.bf16.mxu0 0
  %235 = vmatpush1.bf16.msra.mxu0 %v77
  %236 = vmatprep.subr.bf16.mxu0 0
  %237 = vmatpush1.bf16.msra.mxu0 %v78
  %238 = vmatprep.subr.bf16.mxu0 0
  %239 = vmatpush1.bf16.msra.mxu0 %v79
  %240 = vmatprep.subr.bf16.mxu0 0
  %241 = vmatpush1.bf16.msra.mxu0 %v80
  %242 = vmatprep.subr.bf16.mxu0 0
  %243 = vmatpush1.bf16.msra.mxu0 %v81
  %244 = vmatprep.subr.bf16.mxu0 0
  %245 = vmatpush1.bf16.msra.mxu0 %v82
  %246 = vmatprep.subr.bf16.mxu0 0
  %247 = vmatpush1.bf16.msra.mxu0 0
  %248 = vmatprep.subr.bf16.mxu0 0
  %249 = vmatpush1.bf16.msra.mxu0 0
  %250 = vmatprep.subr.bf16.mxu0 0
  %251 = vmatpush1.bf16.msra.mxu0 0
  %252 = vmatprep.subr.bf16.mxu0 0
  %253 = vmatpush1.bf16.msra.mxu0 0
  %254 = vmatprep.subr.bf16.mxu0 0
  %255 = vmatpush1.bf16.msra.mxu0 0
  %256 = vmatprep.subr.bf16.mxu0 0
  %257 = vmatpush1.bf16.msra.mxu0 0
  %258 = vmatprep.subr.bf16.mxu0 0
  %259 = vmatpush1.bf16.msra.mxu0 0
  %260 = vmatprep.subr.bf16.mxu0 0
  %261 = vmatpush1.bf16.msra.mxu0 0
  %262 = vmatprep.mubr.bf16.mxu0 0
  %263 = vmatmul.mubr.bf16.gmra.mrb[0].mxu0 %v229
  %v264 = vpop.f32.mrb[0].mxu0
  %v265 = vadd.f32 0.0, %v264
  %v266 = vpop.f32.mrb[0].mxu0
  %v267 = vpop.f32.mrb[0].mxu0
  %v268 = vpop.f32.mrb[0].mxu0
  %269 = vdwg.mxu0
  %v270 = vadd.f32 %v228, %v265
  %v271 = vmax.f32 %v270, 0.0
  %s272 = scalar_lea.vmem %s2, 24
  %273 = vst [vmem:[%s272] sm:$0xff] %v271
  %s274 = scalar_lea.vmem %s0, 16
  %v275 = vld [vmem:[%s274] sm:$0xf]
  %v276 = vunpack.c.l.bf16 %v275
  %v277 = vpack.c.bf16 %v271, %v271
  %278 = vmatprep.subr.bf16.mxu0 0
  %279 = vmatpush1.bf16.msra.mxu0 %v75
  %280 = vmatprep.subr.bf16.mxu0 0
  %281 = vmatpush1.bf16.msra.mxu0 %v76
  %282 = vmatprep.subr.bf16.mxu0 0
  %283 = vmatpush1.bf16.msra.mxu0 %v77
  %284 = vmatprep.subr.bf16.mxu0 0
  %285 = vmatpush1.bf16.msra.mxu0 %v78
  %286 = vmatprep.subr.bf16.mxu0 0
  %287 = vmatpush1.bf16.msra.mxu0 %v79
  %288 = vmatprep.subr.bf16.mxu0 0
  %289 = vmatpush1.bf16.msra.mxu0 %v80
  %290 = vmatprep.subr.bf16.mxu0 0
  %291 = vmatpush1.bf16.msra.mxu0 %v81
  %292 = vmatprep.subr.bf16.mxu0 0
  %293 = vmatpush1.bf16.msra.mxu0 %v82
  %294 = vmatprep.subr.bf16.mxu0 0
  %295 = vmatpush1.bf16.msra.mxu0 0
  %296 = vmatprep.subr.bf16.mxu0 0
  %297 = vmatpush1.bf16.msra.mxu0 0
  %298 = vmatprep.subr.bf16.mxu0 0
  %299 = vmatpush1.bf16.msra.mxu0 0
  %300 = vmatprep.subr.bf16.mxu0 0
  %301 = vmatpush1.bf16.msra.mxu0 0
  %302 = vmatprep.subr.bf16.mxu0 0
  %303 = vmatpush1.bf16.msra.mxu0 0
  %304 = vmatprep.subr.bf16.mxu0 0
  %305 = vmatpush1.bf16.msra.mxu0 0
  %306 = vmatprep.subr.bf16.mxu0 0
  %307 = vmatpush1.bf16.msra.mxu0 0
  %308 = vmatprep.subr.bf16.mxu0 0
  %309 = vmatpush1.bf16.msra.mxu0 0
  %310 = vmatprep.mubr.bf16.mxu0 0
  %311 = vmatmul.mubr.bf16.gmra.mrb[0].mxu0 %v277
  %v312 = vpop.f32.mrb[0].mxu0
  %v313 = vadd.f32 0.0, %v312
  %v314 = vpop.f32.mrb[0].mxu0
  %v315 = vpop.f32.mrb[0].mxu0
  %v316 = vpop.f32.mrb[0].mxu0
  %317 = vdwg.mxu0
  %v318 = vadd.f32 %v276, %v313
  %v319 = vmax.f32 %v318, 0.0
  %s320 = scalar_lea.vmem %s2, 32
  %321 = vst [vmem:[%s320] sm:$0xff] %v319
  %s322 = scalar_lea.vmem %s0, 20
  %v323 = vld [vmem:[%s322] sm:$0xf]
  %v324 = vunpack.c.l.bf16 %v323
  %v325 = vpack.c.bf16 %v319, %v319
  %326 = vmatprep.subr.bf16.mxu0 0
  %327 = vmatpush1.bf16.msra.mxu0 %v75
  %328 = vmatprep.subr.bf16.mxu0 0
  %329 = vmatpush1.bf16.msra.mxu0 %v76
  %330 = vmatprep.subr.bf16.mxu0 0
  %331 = vmatpush1.bf16.msra.mxu0 %v77
  %332 = vmatprep.subr.bf16.mxu0 0
  %333 = vmatpush1.bf16.msra.mxu0 %v78
  %334 = vmatprep.subr.bf16.mxu0 0
  %335 = vmatpush1.bf16.msra.mxu0 %v79
  %336 = vmatprep.subr.bf16.mxu0 0
  %337 = vmatpush1.bf16.msra.mxu0 %v80
  %338 = vmatprep.subr.bf16.mxu0 0
  %339 = vmatpush1.bf16.msra.mxu0 %v81
  %340 = vmatprep.subr.bf16.mxu0 0
  %341 = vmatpush1.bf16.msra.mxu0 %v82
  %342 = vmatprep.subr.bf16.mxu0 0
  %343 = vmatpush1.bf16.msra.mxu0 0
  %344 = vmatprep.subr.bf16.mxu0 0
  %345 = vmatpush1.bf16.msra.mxu0 0
  %346 = vmatprep.subr.bf16.mxu0 0
  %347 = vmatpush1.bf16.msra.mxu0 0
  %348 = vmatprep.subr.bf16.mxu0 0
  %349 = vmatpush1.bf16.msra.mxu0 0
  %350 = vmatprep.subr.bf16.mxu0 0
  %351 = vmatpush1.bf16.msra.mxu0 0
  %352 = vmatprep.subr.bf16.mxu0 0
  %353 = vmatpush1.bf16.msra.mxu0 0
  %354 = vmatprep.subr.bf16.mxu0 0
  %355 = vmatpush1.bf16.msra.mxu0 0
  %356 = vmatprep.subr.bf16.mxu0 0
  %357 = vmatpush1.bf16.msra.mxu0 0
  %358 = vmatprep.mubr.bf16.mxu0 0
  %359 = vmatmul.mubr.bf16.gmra.mrb[0].mxu0 %v325
  %v360 = vpop.f32.mrb[0].mxu0
  %v361 = vadd.f32 0.0, %v360
  %v362 = vpop.f32.mrb[0].mxu0
  %v363 = vpop.f32.mrb[0].mxu0
  %v364 = vpop.f32.mrb[0].mxu0
  %365 = vdwg.mxu0
  %v366 = vadd.f32 %v324, %v361
  %v367 = vmax.f32 %v366, 0.0
  %s368 = scalar_lea.vmem %s2, 40
  %369 = vst [vmem:[%s368] sm:$0xff] %v367
  %s370 = scalar_lea.vmem %s0, 24
  %v371 = vld [vmem:[%s370] sm:$0xf]
  %v372 = vunpack.c.l.bf16 %v371
  %v373 = vpack.c.bf16 %v367, %v367
  %374 = vmatprep.subr.bf16.mxu0 0
  %375 = vmatpush1.bf16.msra.mxu0 %v75
  %376 = vmatprep.subr.bf16.mxu0 0
  %377 = vmatpush1.bf16.msra.mxu0 %v76
  %378 = vmatprep.subr.bf16.mxu0 0
  %379 = vmatpush1.bf16.msra.mxu0 %v77
  %380 = vmatprep.subr.bf16.mxu0 0
  %381 = vmatpush1.bf16.msra.mxu0 %v78
  %382 = vmatprep.subr.bf16.mxu0 0
  %383 = vmatpush1.bf16.msra.mxu0 %v79
  %384 = vmatprep.subr.bf16.mxu0 0
  %385 = vmatpush1.bf16.msra.mxu0 %v80
  %386 = vmatprep.subr.bf16.mxu0 0
  %387 = vmatpush1.bf16.msra.mxu0 %v81
  %388 = vmatprep.subr.bf16.mxu0 0
  %389 = vmatpush1.bf16.msra.mxu0 %v82
  %390 = vmatprep.subr.bf16.mxu0 0
  %391 = vmatpush1.bf16.msra.mxu0 0
  %392 = vmatprep.subr.bf16.mxu0 0
  %393 = vmatpush1.bf16.msra.mxu0 0
  %394 = vmatprep.subr.bf16.mxu0 0
  %395 = vmatpush1.bf16.msra.mxu0 0
  %396 = vmatprep.subr.bf16.mxu0 0
  %397 = vmatpush1.bf16.msra.mxu0 0
  %398 = vmatprep.subr.bf16.mxu0 0
  %399 = vmatpush1.bf16.msra.mxu0 0
  %400 = vmatprep.subr.bf16.mxu0 0
  %401 = vmatpush1.bf16.msra.mxu0 0
  %402 = vmatprep.subr.bf16.mxu0 0
  %403 = vmatpush1.bf16.msra.mxu0 0
  %404 = vmatprep.subr.bf16.mxu0 0
  %405 = vmatpush1.bf16.msra.mxu0 0
  %406 = vmatprep.mubr.bf16.mxu0 0
  %407 = vmatmul.mubr.bf16.gmra.mrb[0].mxu0 %v373
  %v408 = vpop.f32.mrb[0].mxu0
  %v409 = vadd.f32 0.0, %v408
  %v410 = vpop.f32.mrb[0].mxu0
  %v411 = vpop.f32.mrb[0].mxu0
  %v412 = vpop.f32.mrb[0].mxu0
  %413 = vdwg.mxu0
  %v414 = vadd.f32 %v372, %v409
  %v415 = vmax.f32 %v414, 0.0
  %s416 = scalar_lea.vmem %s2, 48
  %417 = vst [vmem:[%s416] sm:$0xff] %v415
  %s418 = scalar_lea.vmem %s0, 28
  %v419 = vld [vmem:[%s418] sm:$0xf]
  %v420 = vunpack.c.l.bf16 %v419
  %v421 = vpack.c.bf16 %v415, %v415
  %422 = vmatprep.subr.bf16.mxu0 0
  %423 = vmatpush1.bf16.msra.mxu0 %v75
  %424 = vmatprep.subr.bf16.mxu0 0
  %425 = vmatpush1.bf16.msra.mxu0 %v76
  %426 = vmatprep.subr.bf16.mxu0 0
  %427 = vmatpush1.bf16.msra.mxu0 %v77
  %428 = vmatprep.subr.bf16.mxu0 0
  %429 = vmatpush1.bf16.msra.mxu0 %v78
  %430 = vmatprep.subr.bf16.mxu0 0
  %431 = vmatpush1.bf16.msra.mxu0 %v79
  %432 = vmatprep.subr.bf16.mxu0 0
  %433 = vmatpush1.bf16.msra.mxu0 %v80
  %434 = vmatprep.subr.bf16.mxu0 0
  %435 = vmatpush1.bf16.msra.mxu0 %v81
  %436 = vmatprep.subr.bf16.mxu0 0
  %437 = vmatpush1.bf16.msra.mxu0 %v82
  %438 = vmatprep.subr.bf16.mxu0 0
  %439 = vmatpush1.bf16.msra.mxu0 0
  %440 = vmatprep.subr.bf16.mxu0 0
  %441 = vmatpush1.bf16.msra.mxu0 0
  %442 = vmatprep.subr.bf16.mxu0 0
  %443 = vmatpush1.bf16.msra.mxu0 0
  %444 = vmatprep.subr.bf16.mxu0 0
  %445 = vmatpush1.bf16.msra.mxu0 0
  %446 = vmatprep.subr.bf16.mxu0 0
  %447 = vmatpush1.bf16.msra.mxu0 0
  %448 = vmatprep.subr.bf16.mxu0 0
  %449 = vmatpush1.bf16.msra.mxu0 0
  %450 = vmatprep.subr.bf16.mxu0 0
  %451 = vmatpush1.bf16.msra.mxu0 0
  %452 = vmatprep.subr.bf16.mxu0 0
  %453 = vmatpush1.bf16.msra.mxu0 0
  %454 = vmatprep.mubr.bf16.mxu0 0
  %455 = vmatmul.mubr.bf16.gmra.mrb[0].mxu0 %v421
  %v456 = vpop.f32.mrb[0].mxu0
  %v457 = vadd.f32 0.0, %v456
  %v458 = vpop.f32.mrb[0].mxu0
  %v459 = vpop.f32.mrb[0].mxu0
  %v460 = vpop.f32.mrb[0].mxu0
  %461 = vdwg.mxu0
  %v462 = vadd.f32 %v420, %v457
  %v463 = vmax.f32 %v462, 0.0
  %s464 = scalar_lea.vmem %s2, 56
  %465 = vst [vmem:[%s464] sm:$0xff] %v463
  %466 = vst [vmem:[#allocation3] sm:$0xff] %v463
  // Predicated region
  $region45: #{simple_rnn_pallas.1} parent=0 // pred_check
    _
  $region46: #{simple_rnn_pallas.1} parent=0 // pred_check_branch
    %468 = sbr.rel (0) target = $region48
  $region47: #{simple_rnn_pallas.1} parent=0 // pred_region
    _
  $region48: #{simple_rnn_pallas.1} parent=0 // pred_fallthru
    _
  // Predicated region
  $region49: #{simple_rnn_pallas.1} parent=0 // pred_check
    _
  $region50: #{simple_rnn_pallas.1} parent=0 // pred_check_branch
    %470 = sbr.rel (0) target = $region52
  $region51: #{simple_rnn_pallas.1} parent=0 // pred_region
    _
  $region52: #{simple_rnn_pallas.1} parent=0 // pred_fallthru
    _

</llo_original>
